<compile_context>
chip_gen: v7x
topology: tpu7x:2x2x1
jax: 0.10.0
libtpu: 0.0.40
codegen_flags: <defaults>
</compile_context>

<pallas_src>
import functools

import jax
import jax.numpy as jnp
from jax import lax
from jax.experimental import pallas as pl
from jax.experimental.pallas import tpu as pltpu  # noqa: F401  (TPU backend)


def policy_kernel(x_ref, w1_ref, w2_ref, out_ref):
    x = x_ref[...]    # (B, I)  f32
    w1 = w1_ref[...]  # (H, I)  f32  (PyTorch Linear layout, NOT transposed)
    w2 = w2_ref[...]  # (O, H)  f32  (PyTorch Linear layout, NOT transposed)

    # affine1 (no bias): x @ w1.T via dot_general contracting x dim 1 with w1 dim 1.
    h = lax.dot_general(x, w1, (((1,), (1,)), ((), ())),
                        preferred_element_type=jnp.float32)      # (B, H) f32
    h = jnp.maximum(h, 0.0)                                       # ReLU

    # affine2 (no bias): h @ w2.T
    logits = lax.dot_general(h, w2, (((1,), (1,)), ((), ())),
                             preferred_element_type=jnp.float32)  # (B, O) f32

    # softmax over dim=0 (batch axis), numerically stable, all f32.
    m = jnp.max(logits, axis=0, keepdims=True)
    e = jnp.exp(logits - m)
    denom = jnp.sum(e, axis=0, keepdims=True)
    out_ref[...] = (e * (1.0 / denom)).astype(out_ref.dtype)


@functools.partial(jax.jit, static_argnames=())
def policy_forward(x, w1, w2):
    """x: (B, input); w1: (hidden, input); w2: (output, hidden) -- PyTorch layout, f32."""
    B, I = x.shape
    H, _ = w1.shape
    O, _ = w2.shape

    return pl.pallas_call(
        policy_kernel,
        out_shape=jax.ShapeDtypeStruct((B, O), jnp.float32),
        in_specs=[
            pl.BlockSpec((B, I), lambda: (0, 0)),
            pl.BlockSpec((H, I), lambda: (0, 0)),
            pl.BlockSpec((O, H), lambda: (0, 0)),
        ],
        out_specs=pl.BlockSpec((B, O), lambda: (0, 0)),
    )(x, w1, w2)


def policy_forward_ref_f32(x, w1, w2):
    """Pure-f32 JAX reference mirroring the PyTorch forward exactly."""
    h = jnp.maximum(x @ w1.T, 0.0)
    logits = h @ w2.T
    return jax.nn.softmax(logits, axis=0)


if __name__ == "__main__":
    batch = 8
    input_size = 32
    hidden_size = 32
    output_size = 16

    key = jax.random.PRNGKey(0)
    kx, k1, k2 = jax.random.split(key, 3)

    # nn.Linear default init: U(-1/sqrt(fan_in), 1/sqrt(fan_in)), no bias.
    bound1 = 1.0 / (input_size ** 0.5)
    bound2 = 1.0 / (hidden_size ** 0.5)
    w1 = jax.random.uniform(k1, (hidden_size, input_size), jnp.float32,
                            minval=-bound1, maxval=bound1)
    w2 = jax.random.uniform(k2, (output_size, hidden_size), jnp.float32,
                            minval=-bound2, maxval=bound2)
    x = jax.random.normal(kx, (batch, input_size), jnp.float32)

    out = policy_forward(x, w1, w2)
    out = jax.block_until_ready(out)
    assert out.shape == (batch, output_size)

    # Check against the exact f32 PyTorch-equivalent forward.
    ref = policy_forward_ref_f32(x, w1, w2)
    assert jnp.allclose(out, ref, atol=1e-4, rtol=1e-4), "mismatch vs f32 reference"

    # softmax over dim=0 -> every output column sums to 1.
    assert jnp.allclose(jnp.sum(out, axis=0),
                        jnp.ones((output_size,), jnp.float32), atol=1e-4)

    print("KERNEL_OK")
</pallas_src>

<mosaic_0001>
module attributes {stable_mosaic.version = 11 : i64} {
  func.func @policy_kernel(%arg0: memref<8x32xf32, #tpu.memory_space<vmem>>, %arg1: memref<32x32xf32, #tpu.memory_space<vmem>>, %arg2: memref<16x32xf32, #tpu.memory_space<vmem>>, %arg3: memref<8x16xf32, #tpu.memory_space<vmem>>) attributes {dimension_semantics = [], scalar_prefetch = 0 : i64, scratch_operands = 0 : i64, tpu.core_type = #tpu.core_type<tc>} {
    %c0 = arith.constant 0 : index
    %c0_0 = arith.constant 0 : index
    %0 = vector.load %arg0[%c0, %c0_0] : memref<8x32xf32, #tpu.memory_space<vmem>>, vector<8x32xf32>
    %c0_1 = arith.constant 0 : index
    %c0_2 = arith.constant 0 : index
    %1 = vector.load %arg1[%c0_1, %c0_2] : memref<32x32xf32, #tpu.memory_space<vmem>>, vector<32x32xf32>
    %c0_3 = arith.constant 0 : index
    %c0_4 = arith.constant 0 : index
    %2 = vector.load %arg2[%c0_3, %c0_4] : memref<16x32xf32, #tpu.memory_space<vmem>>, vector<16x32xf32>
    %cst = arith.constant dense<0.000000e+00> : vector<8x32xf32>
    %3 = tpu.matmul %0, %1, %cst {dimension_numbers = #tpu.dot_dimension_numbers<[1], [1], [0], [0], [0, 0, 1, 0], [], []>} : vector<8x32xf32>, vector<32x32xf32>, vector<8x32xf32> -> vector<8x32xf32>
    %cst_5 = arith.constant 0.000000e+00 : f32
    %4 = vector.broadcast %cst_5 : f32 to vector<8x32xf32>
    %5 = arith.maximumf %3, %4 : vector<8x32xf32>
    %cst_6 = arith.constant dense<0.000000e+00> : vector<8x16xf32>
    %6 = tpu.matmul %5, %2, %cst_6 {dimension_numbers = #tpu.dot_dimension_numbers<[1], [1], [0], [0], [0, 0, 1, 0], [], []>} : vector<8x32xf32>, vector<16x32xf32>, vector<8x16xf32> -> vector<8x16xf32>
    %cst_7 = arith.constant dense<0xFF800000> : vector<16xf32>
    %7 = vector.multi_reduction <maximumf>, %6, %cst_7 [0] : vector<8x16xf32> to vector<16xf32>
    %8 = vector.shape_cast %7 : vector<16xf32> to vector<1x16xf32>
    %9 = vector.broadcast %8 : vector<1x16xf32> to vector<8x16xf32>
    %10 = arith.subf %6, %9 : vector<8x16xf32>
    %11 = math.exp %10 : vector<8x16xf32>
    %cst_8 = arith.constant dense<0.000000e+00> : vector<16xf32>
    %12 = vector.multi_reduction <add>, %11, %cst_8 [0] : vector<8x16xf32> to vector<16xf32>
    %13 = vector.shape_cast %12 : vector<16xf32> to vector<1x16xf32>
    %cst_9 = arith.constant 1.000000e+00 : f32
    %14 = vector.broadcast %cst_9 : f32 to vector<1x16xf32>
    %15 = arith.divf %14, %13 : vector<1x16xf32>
    %16 = vector.broadcast %15 : vector<1x16xf32> to vector<8x16xf32>
    %17 = arith.mulf %11, %16 : vector<8x16xf32>
    %c0_10 = arith.constant 0 : index
    %c0_11 = arith.constant 0 : index
    %18 = vector.load %arg3[%c0_10, %c0_11] : memref<8x16xf32, #tpu.memory_space<vmem>>, vector<8x16xf32>
    tpu.vector_store %arg3[%c0_10, %c0_11], %17 {strides = array<i32>} : memref<8x16xf32, #tpu.memory_space<vmem>>, vector<8x16xf32>,
    return
  }
}

</mosaic_0001>

<llo_original>
// kernel: policy_forward.1
$region0: #{policy_forward.1}
  #allocation0 [shape = 'u32[]', space=smem, size = 0x4, offset = 0x4, fixed_abs, tag = 'smem constant byte address 0x4 - core index']
  #allocation1 [shape = 'u32[144,128]{1,0:T(1,128)}', space=vmem, size = 0x12000, scoped, tag = 'internal scratch']
  %s0 = inlined_call_operand.hbm [shape: f32[8,32], index: 0, kind: input, shape index: {}]
  %s1 = inlined_call_operand.hbm [shape: f32[32,32], index: 1, kind: input, shape index: {}]
  %s2 = inlined_call_operand.hbm [shape: f32[16,32], index: 2, kind: input, shape index: {}]
  %s3 = inlined_call_operand.hbm [shape: f32[8,16], index: 3, kind: output, shape index: {}]
  %s4 = sld [smem:[#allocation0]]
  $region34: #{policy_forward.1} parent=0
    _
  %s6 = ssub.s32 1, %s4
  %s7 = scalar_select 0, %s6, %s4
  $region1: #{policy_forward.1} parent=0
    #allocation2 [shape = 'u8[4096]{0}', space=vmem, size = 0x1000, scoped, tag = 'input window, operand 0, single buffered']
    #allocation3 [shape = 's32[1]{0}', space=sflag, size = 0x4, scoped, tag = 'scoped memory for policy_forward.1']
    #allocation4 [shape = 's32[1]{0}', space=sflag, size = 0x4, scoped, tag = 'scoped memory for policy_forward.1']
    #allocation5 [shape = 'u8[16384]{0}', space=vmem, size = 0x4000, scoped, tag = 'input window, operand 1, single buffered']
    #allocation6 [shape = 's32[1]{0}', space=sflag, size = 0x4, scoped, tag = 'scoped memory for policy_forward.1']
    #allocation7 [shape = 'u8[8192]{0}', space=vmem, size = 0x2000, scoped, tag = 'input window, operand 2, single buffered']
    #allocation8 [shape = 'u8[4096]{0}', space=vmem, size = 0x1000, scoped, tag = 'output window, operand 0, single buffered']
    %8 = vsyncpa [#allocation3], 0
    %9 = vsyncpa [#allocation6], 0
    %10 = vsyncpa [#allocation4], 0
    // Predicated region
    $region2: #{policy_forward.1} parent=1 // pred_check
      _
    $region3: #{policy_forward.1} parent=1 // pred_check_branch
      %12 = sbr.rel (0) target = $region5
    $region4: #{policy_forward.1} parent=1 // pred_region
      %s14 = ssub.s32 128, 128
      %15 = vsyncadd [#allocation3], %s14
      %s17 = sshll.u32 [#allocation2], 4
      %s18 = int_to_ptr.vmem [resolvable:$true] %s17
      %20 = dma.hbm_to_vmem [thread:$0]  %s0, 128, %s18, [#allocation3]
    $region5: #{policy_forward.1} parent=1 // pred_fallthru
      _
    // Predicated region
    $region6: #{policy_forward.1} parent=1 // pred_check
      _
    $region7: #{policy_forward.1} parent=1 // pred_check_branch
      %22 = sbr.rel (0) target = $region9
    $region8: #{policy_forward.1} parent=1 // pred_region
      %s24 = ssub.s32 512, 512
      %25 = vsyncadd [#allocation6], %s24
      %s26 = sshll.u32 [#allocation5], 4
      %s27 = int_to_ptr.vmem [resolvable:$true] %s26
      %32 = dma.hbm_to_vmem [thread:$0]  %s1, 512, %s27, [#allocation6], 128, 128, 8
    $region9: #{policy_forward.1} parent=1 // pred_fallthru
      _
    // Predicated region
    $region10: #{policy_forward.1} parent=1 // pred_check
      _
    $region11: #{policy_forward.1} parent=1 // pred_check_branch
      %34 = sbr.rel (0) target = $region13
    $region12: #{policy_forward.1} parent=1 // pred_region
      %s36 = ssub.s32 256, 256
      %37 = vsyncadd [#allocation6], %s36
      %s38 = sshll.u32 [#allocation7], 4
      %s39 = int_to_ptr.vmem [resolvable:$true] %s38
      %44 = dma.hbm_to_vmem [thread:$0]  %s2, 256, %s39, [#allocation6], 128, 128, 8
    $region13: #{policy_forward.1} parent=1 // pred_fallthru
      _
    // Predicated region
    $region14: #{policy_forward.1} parent=1 // pred_check
      _
    $region15: #{policy_forward.1} parent=1 // pred_check_branch
      %46 = sbr.rel (0) target = $region17
    $region16: #{policy_forward.1} parent=1 // pred_region
      %47 = dma.done [#allocation3], 128
    $region17: #{policy_forward.1} parent=1 // pred_fallthru
      _
    // Predicated region
    $region18: #{policy_forward.1} parent=1 // pred_check
      _
    $region19: #{policy_forward.1} parent=1 // pred_check_branch
      %49 = sbr.rel (0) target = $region21
    $region20: #{policy_forward.1} parent=1 // pred_region
      %50 = dma.done [#allocation6], 512
    $region21: #{policy_forward.1} parent=1 // pred_fallthru
      _
    // Predicated region
    $region22: #{policy_forward.1} parent=1 // pred_check
      _
    $region23: #{policy_forward.1} parent=1 // pred_check_branch
      %52 = sbr.rel (0) target = $region25
    $region24: #{policy_forward.1} parent=1 // pred_region
      %53 = dma.done [#allocation6], 256
    $region25: #{policy_forward.1} parent=1 // pred_fallthru
      _
    %v54 = vld [vmem:[#allocation2] sm:$0xff]
    %v55 = vld [vmem:[#allocation5] sm:$0xff]
    %v56 = vld [vmem:[#allocation5 + $0x8] sm:$0xff]
    %v57 = vld [vmem:[#allocation5 + $0x10] sm:$0xff]
    %v58 = vld [vmem:[#allocation5 + $0x18] sm:$0xff]
    %v59 = vld [vmem:[#allocation7] sm:$0xff]
    %v60 = vld [vmem:[#allocation7 + $0x8] sm:$0xff]
    %vm61 = vcmask 261120
    %v63 = vsel %vm61, %v54, 0
    %v66 = vsel %vm61, %v55, 0
    %v69 = vsel %vm61, %v56, 0
    %v72 = vsel %vm61, %v57, 0
    %v75 = vsel %vm61, %v58, 0
    %77 = vmatprep.subr.mxu0 0.0
    %78 = vmatpush1.xpose.msra.mxu0 %v66
    %79 = vmatprep.subr.mxu0 0.0
    %80 = vmatpush1.xpose.msra.mxu0 %v69
    %81 = vmatprep.subr.mxu0 0.0
    %82 = vmatpush1.xpose.msra.mxu0 %v72
    %83 = vmatprep.subr.mxu0 0.0
    %84 = vmatpush1.xpose.msra.mxu0 %v75
    %85 = vmatprep.subr.mxu0 0.0
    %86 = vmatpush1.xpose.msra.mxu0 0.0
    %87 = vmatprep.subr.mxu0 0.0
    %88 = vmatpush1.xpose.msra.mxu0 0.0
    %89 = vmatprep.subr.mxu0 0.0
    %90 = vmatpush1.xpose.msra.mxu0 0.0
    %91 = vmatprep.subr.mxu0 0.0
    %92 = vmatpush1.xpose.msra.mxu0 0.0
    %93 = vmatprep.subr.mxu0 0.0
    %94 = vmatpush1.xpose.msra.mxu0 0.0
    %95 = vmatprep.subr.mxu0 0.0
    %96 = vmatpush1.xpose.msra.mxu0 0.0
    %97 = vmatprep.subr.mxu0 0.0
    %98 = vmatpush1.xpose.msra.mxu0 0.0
    %99 = vmatprep.subr.mxu0 0.0
    %100 = vmatpush1.xpose.msra.mxu0 0.0
    %101 = vmatprep.subr.mxu0 0.0
    %102 = vmatpush1.xpose.msra.mxu0 0.0
    %103 = vmatprep.subr.mxu0 0.0
    %104 = vmatpush1.xpose.msra.mxu0 0.0
    %105 = vmatprep.subr.mxu0 0.0
    %106 = vmatpush1.xpose.msra.mxu0 0.0
    %107 = vmatprep.subr.mxu0 0.0
    %108 = vmatpush1.xpose.msra.mxu0 0.0
    %109 = vmatprep.subr.mxu0 0.0
    %110 = vmatpush1.xpose.msra.mxu0 0.0
    %111 = vmatprep.subr.mxu0 0.0
    %112 = vmatpush1.xpose.msra.mxu0 0.0
    %113 = vmatprep.subr.mxu0 0.0
    %114 = vmatpush1.xpose.msra.mxu0 0.0
    %115 = vmatprep.subr.mxu0 0.0
    %116 = vmatpush1.xpose.msra.mxu0 0.0
    %117 = vmatprep.subr.mxu0 0.0
    %118 = vmatpush1.xpose.msra.mxu0 0.0
    %119 = vmatprep.subr.mxu0 0.0
    %120 = vmatpush1.xpose.msra.mxu0 0.0
    %121 = vmatprep.subr.mxu0 0.0
    %122 = vmatpush1.xpose.msra.mxu0 0.0
    %123 = vmatprep.subr.mxu0 0.0
    %124 = vmatpush1.xpose.msra.mxu0 0.0
    %125 = vmatprep.subr.mxu0 0.0
    %126 = vmatpush1.xpose.msra.mxu0 0.0
    %127 = vmatprep.subr.mxu0 0.0
    %128 = vmatpush1.xpose.msra.mxu0 0.0
    %129 = vmatprep.subr.mxu0 0.0
    %130 = vmatpush1.xpose.msra.mxu0 0.0
    %131 = vmatprep.subr.mxu0 0.0
    %132 = vmatpush1.xpose.msra.mxu0 0.0
    %133 = vmatprep.subr.mxu0 0.0
    %134 = vmatpush1.xpose.msra.mxu0 0.0
    %135 = vmatprep.subr.mxu0 0.0
    %136 = vmatpush1.xpose.msra.mxu0 0.0
    %137 = vmatprep.subr.mxu0 0.0
    %138 = vmatpush1.xpose.msra.mxu0 0.0
    %139 = vmatprep.subr.mxu0 0.0
    %140 = vmatpush1.xpose.msra.mxu0 0.0
    %141 = vmatprep.mubr.f32.mxu0 0.0
    %142 = vmatmul.mubr.f32.gmra.mrb[0].mxu0 %v63
    %v143 = vpop.f32.mrb[0].mxu0
    %v144 = vadd.f32 0.0, %v143
    %v145 = vpop.f32.mrb[0].mxu0
    %146 = vdwg.mxu0
    %v147 = vmax.f32 %v144, 0.0
    %v149 = vsel %vm61, %v147, 0
    %v152 = vsel %vm61, %v59, 0
    %v155 = vsel %vm61, %v60, 0
    %157 = vmatprep.subr.mxu0 0.0
    %158 = vmatpush1.xpose.msra.mxu0 %v152
    %159 = vmatprep.subr.mxu0 0.0
    %160 = vmatpush1.xpose.msra.mxu0 %v155
    %161 = vmatprep.subr.mxu0 0.0
    %162 = vmatpush1.xpose.msra.mxu0 0.0
    %163 = vmatprep.subr.mxu0 0.0
    %164 = vmatpush1.xpose.msra.mxu0 0.0
    %165 = vmatprep.subr.mxu0 0.0
    %166 = vmatpush1.xpose.msra.mxu0 0.0
    %167 = vmatprep.subr.mxu0 0.0
    %168 = vmatpush1.xpose.msra.mxu0 0.0
    %169 = vmatprep.subr.mxu0 0.0
    %170 = vmatpush1.xpose.msra.mxu0 0.0
    %171 = vmatprep.subr.mxu0 0.0
    %172 = vmatpush1.xpose.msra.mxu0 0.0
    %173 = vmatprep.subr.mxu0 0.0
    %174 = vmatpush1.xpose.msra.mxu0 0.0
    %175 = vmatprep.subr.mxu0 0.0
    %176 = vmatpush1.xpose.msra.mxu0 0.0
    %177 = vmatprep.subr.mxu0 0.0
    %178 = vmatpush1.xpose.msra.mxu0 0.0
    %179 = vmatprep.subr.mxu0 0.0
    %180 = vmatpush1.xpose.msra.mxu0 0.0
    %181 = vmatprep.subr.mxu0 0.0
    %182 = vmatpush1.xpose.msra.mxu0 0.0
    %183 = vmatprep.subr.mxu0 0.0
    %184 = vmatpush1.xpose.msra.mxu0 0.0
    %185 = vmatprep.subr.mxu0 0.0
    %186 = vmatpush1.xpose.msra.mxu0 0.0
    %187 = vmatprep.subr.mxu0 0.0
    %188 = vmatpush1.xpose.msra.mxu0 0.0
    %189 = vmatprep.subr.mxu0 0.0
    %190 = vmatpush1.xpose.msra.mxu0 0.0
    %191 = vmatprep.subr.mxu0 0.0
    %192 = vmatpush1.xpose.msra.mxu0 0.0
    %193 = vmatprep.subr.mxu0 0.0
    %194 = vmatpush1.xpose.msra.mxu0 0.0
    %195 = vmatprep.subr.mxu0 0.0
    %196 = vmatpush1.xpose.msra.mxu0 0.0
    %197 = vmatprep.subr.mxu0 0.0
    %198 = vmatpush1.xpose.msra.mxu0 0.0
    %199 = vmatprep.subr.mxu0 0.0
    %200 = vmatpush1.xpose.msra.mxu0 0.0
    %201 = vmatprep.subr.mxu0 0.0
    %202 = vmatpush1.xpose.msra.mxu0 0.0
    %203 = vmatprep.subr.mxu0 0.0
    %204 = vmatpush1.xpose.msra.mxu0 0.0
    %205 = vmatprep.subr.mxu0 0.0
    %206 = vmatpush1.xpose.msra.mxu0 0.0
    %207 = vmatprep.subr.mxu0 0.0
    %208 = vmatpush1.xpose.msra.mxu0 0.0
    %209 = vmatprep.subr.mxu0 0.0
    %210 = vmatpush1.xpose.msra.mxu0 0.0
    %211 = vmatprep.subr.mxu0 0.0
    %212 = vmatpush1.xpose.msra.mxu0 0.0
    %213 = vmatprep.subr.mxu0 0.0
    %214 = vmatpush1.xpose.msra.mxu0 0.0
    %215 = vmatprep.subr.mxu0 0.0
    %216 = vmatpush1.xpose.msra.mxu0 0.0
    %217 = vmatprep.subr.mxu0 0.0
    %218 = vmatpush1.xpose.msra.mxu0 0.0
    %219 = vmatprep.subr.mxu0 0.0
    %220 = vmatpush1.xpose.msra.mxu0 0.0
    %221 = vmatprep.mubr.f32.mxu0 0.0
    %222 = vmatmul.mubr.f32.gmra.mrb[0].mxu0 %v149
    %v223 = vpop.f32.mrb[0].mxu0
    %v224 = vadd.f32 0.0, %v223
    %v225 = vpop.f32.mrb[0].mxu0
    %226 = vdwg.mxu0
    %vm227 = vcmask 130048
    %v228 = vsel %vm227, %v224, -inf
    %v229 = vrot.slane %v228, 4
    %v230 = vmax.f32 %v228, %v229
    %v231 = vrot.slane %v230, 2
    %v232 = vmax.f32 %v230, %v231
    %v233 = vrot.slane %v232, 1
    %v234 = vmax.f32 %v232, %v233
    %v235 = vsub.f32 %v224, %v234
    %v236 = vmul.f32 %v235, 1.442695
    %v237 = vpow.pop %v236
    %v238 = vsel %vm227, %v237, 0.0
    %v239 = vrot.slane %v238, 4
    %v240 = vadd.f32 %v238, %v239
    %v241 = vrot.slane %v240, 2
    %v242 = vadd.f32 %v240, %v241
    %v243 = vrot.slane %v242, 1
    %v244 = vadd.f32 %v242, %v243
    %v245 = vrcp.pop %v244
    %v246 = vmul.f32 1.0, %v245
    %v247 = vmul.f32 %v237, %v246
    %248 = vst.msk [vmem:[#allocation8] sm:$0xff] %vm227, %v247
    // Predicated region
    $region26: #{policy_forward.1} parent=1 // pred_check
      _
    $region27: #{policy_forward.1} parent=1 // pred_check_branch
      %250 = sbr.rel (0) target = $region29
    $region28: #{policy_forward.1} parent=1 // pred_region
      %s252 = ssub.s32 128, 128
      %253 = vsyncadd [#allocation4], %s252
      %s255 = sshll.u32 [#allocation8], 4
      %s256 = int_to_ptr.vmem [resolvable:$true] %s255
      %258 = dma.vmem_to_hbm [thread:$0]  %s256, 128, %s3, [#allocation4]
    $region29: #{policy_forward.1} parent=1 // pred_fallthru
      _
    // Predicated region
    $region30: #{policy_forward.1} parent=1 // pred_check
      _
    $region31: #{policy_forward.1} parent=1 // pred_check_branch
      %260 = sbr.rel (0) target = $region33
    $region32: #{policy_forward.1} parent=1 // pred_region
      %261 = dma.done [#allocation4], 128
    $region33: #{policy_forward.1} parent=1 // pred_fallthru
      _
    %262 = vsyncpa [#allocation3], 1
    %263 = vsyncpa [#allocation6], 1
    %264 = vsyncpa [#allocation4], 1

</llo_original>
